<compile_context>
chip_gen: v7x
topology: tpu7x:2x2x1
jax: 0.10.0
libtpu: 0.0.40
codegen_flags: <defaults>
</compile_context>

<pallas_src>
import functools

import jax
import jax.numpy as jnp
from jax.experimental import pallas as pl
from jax.experimental.pallas import tpu as pltpu

LN_EPS = 1e-5


def _round_up(v, m):
    return (v + m - 1) // m * m


def _patch_embed_kernel(a_ref, w_ref, b_ref, g_ref, beta_ref, o_ref, *, e_real):
    # a_ref:    (TM, K_pad)  patch-matrix row tile            (VMEM)
    # w_ref:    (K_pad, E_pad) projection weight (resident)   (VMEM)
    # b_ref:    (1, E_pad)   projection bias   (f32, 0-padded)
    # g_ref:    (1, E_pad)   LayerNorm gamma   (f32, 0-padded)
    # beta_ref: (1, E_pad)   LayerNorm beta    (f32, 0-padded)
    # o_ref:    (TM, E_pad)  output row tile
    acc = jnp.dot(a_ref[...], w_ref[...], preferred_element_type=jnp.float32)
    acc = acc + b_ref[...]                       # padded cols of acc are exactly 0

    e_pad = acc.shape[-1]
    inv_e = jnp.float32(1.0 / e_real)

    # mean over the real E columns (padded columns contribute exactly 0)
    mean = jnp.sum(acc, axis=-1, keepdims=True) * inv_e
    centered = acc - mean

    if e_pad != e_real:
        lane = jax.lax.broadcasted_iota(jnp.int32, (1, e_pad), 1)
        centered_m = jnp.where(lane < e_real, centered, 0.0)
    else:
        centered_m = centered
    var = jnp.sum(centered_m * centered_m, axis=-1, keepdims=True) * inv_e

    normed = centered * jax.lax.rsqrt(var + LN_EPS)      # rsqrt -> EUP slot
    # gamma/beta padded with zeros -> padded output columns are 0 (sliced off later)
    o_ref[...] = (normed * g_ref[...] + beta_ref[...]).astype(o_ref.dtype)


def patch_embed(x, w, b, gamma, beta, patch_size, *,
                tm=512, matmul_dtype=jnp.bfloat16):
    """x: (B, C, H, W) NCHW, w: (E, C, ph, pw), b/gamma/beta: (E,).

    Returns (out (B, num_patches, E), (Hp, Wp)) matching
    `norm(proj(x).flatten(2).transpose(1, 2))`.
    """
    B, C, H, W = x.shape
    ph, pw = patch_size
    assert H % ph == 0 and W % pw == 0
    Hp, Wp = H // ph, W // pw
    E = w.shape[0]
    K = C * ph * pw
    N = Hp * Wp
    M = B * N

    # --- glue: extract non-overlapping patches, flatten in (C, ph, pw) order ---
    # (B, C, Hp, ph, Wp, pw) -> (B, Hp, Wp, C, ph, pw) -> (B*N, C*ph*pw)
    patches = x.reshape(B, C, Hp, ph, Wp, pw)
    patches = patches.transpose(0, 2, 4, 1, 3, 5).reshape(M, K)

    # conv weight (E, C, ph, pw) -> (K, E)
    w_mat = w.reshape(E, K).T

    # bf16 matmul operands (f32 accumulation in-kernel); LN params stay f32.
    if matmul_dtype is not None:
        patches = patches.astype(matmul_dtype)
        w_mat = w_mat.astype(matmul_dtype)

    # Pad K and E to multiples of 128 (lane-dense, MXU-friendly). Exact math.
    K_pad = _round_up(K, 128)
    E_pad = _round_up(E, 128)
    if K_pad != K:
        patches = jnp.pad(patches, ((0, 0), (0, K_pad - K)))
        w_mat = jnp.pad(w_mat, ((0, K_pad - K), (0, 0)))
    if E_pad != E:
        w_mat = jnp.pad(w_mat, ((0, 0), (0, E_pad - E)))

    def _pad_vec(v):
        v = v.astype(jnp.float32).reshape(1, E)
        if E_pad != E:
            v = jnp.pad(v, ((0, 0), (0, E_pad - E)))
        return v

    b2, g2, beta2 = _pad_vec(b), _pad_vec(gamma), _pad_vec(beta)

    # Row tile: multiple of 8 (or the full M). Double-buffered A/out tiles plus
    # the resident weight fit comfortably in the default scoped VMEM on all of
    # v5e / v6e / v7x for realistic ViT sizes at TM=512.
    TM = min(tm, M)
    grid_m = pl.cdiv(M, TM)

    kernel = functools.partial(_patch_embed_kernel, e_real=E)

    out = pl.pallas_call(
        kernel,
        out_shape=jax.ShapeDtypeStruct((M, E_pad), x.dtype),
        grid_spec=pltpu.PrefetchScalarGridSpec(
            num_scalar_prefetch=0,
            grid=(grid_m,),
            in_specs=[
                pl.BlockSpec((TM, K_pad), lambda i: (i, 0)),     # A row tile
                pl.BlockSpec((K_pad, E_pad), lambda i: (0, 0)),  # W (resident)
                pl.BlockSpec((1, E_pad), lambda i: (0, 0)),      # bias
                pl.BlockSpec((1, E_pad), lambda i: (0, 0)),      # gamma
                pl.BlockSpec((1, E_pad), lambda i: (0, 0)),      # beta
            ],
            out_specs=pl.BlockSpec((TM, E_pad), lambda i: (i, 0)),
        ),
        compiler_params=pltpu.CompilerParams(
            dimension_semantics=("parallel",),   # row tiles are independent
        ),
    )(patches, w_mat, b2, g2, beta2)

    out = out[:, :E].reshape(B, N, E)
    return out, (Hp, Wp)


if __name__ == "__main__":
    # Small config consistent with PatchEmbed(img_size=16, patch_size=4,
    # in_channels=4, embed_dim=32).
    B, C, H, W = 2, 4, 16, 16
    ph, pw = 4, 4
    E = 32

    key = jax.random.PRNGKey(0)
    kx, kw, kb = jax.random.split(key, 3)

    x = jax.random.normal(kx, (B, C, H, W), dtype=jnp.float32)
    w = jax.random.normal(kw, (E, C, ph, pw), dtype=jnp.float32) * 0.02
    b = jax.random.normal(kb, (E,), dtype=jnp.float32) * 0.01
    gamma = jnp.ones((E,), dtype=jnp.float32)
    beta = jnp.zeros((E,), dtype=jnp.float32)

    out, (Hp, Wp) = patch_embed(x, w, b, gamma, beta, (ph, pw))
    jax.block_until_ready(out)

    assert out.shape == (B, (H // ph) * (W // pw), E)
    assert (Hp, Wp) == (H // ph, W // pw)
    assert bool(jnp.all(jnp.isfinite(out)))
    print("KERNEL_OK")
</pallas_src>

<mosaic_0001>
module attributes {stable_mosaic.version = 11 : i64} {
  func.func @_patch_embed_kernel(%arg0: i32, %arg1: memref<32x128xbf16, #tpu.memory_space<vmem>>, %arg2: memref<128x128xbf16, #tpu.memory_space<vmem>>, %arg3: memref<1x128xf32, #tpu.memory_space<vmem>>, %arg4: memref<1x128xf32, #tpu.memory_space<vmem>>, %arg5: memref<1x128xf32, #tpu.memory_space<vmem>>, %arg6: memref<32x128xf32, #tpu.memory_space<vmem>>) attributes {dimension_semantics = [#tpu.dimension_semantics<parallel>], iteration_bounds = array<i64: 1>, scalar_prefetch = 0 : i64, scratch_operands = 0 : i64, tpu.core_type = #tpu.core_type<tc>, window_params = [{transform_indices = @transform_0, window_bounds = array<i64: 32, 128>}, {pipeline_mode = #tpu.pipeline_mode<synchronous>, transform_indices = @transform_1, window_bounds = array<i64: 128, 128>}, {pipeline_mode = #tpu.pipeline_mode<synchronous>, transform_indices = @transform_2, window_bounds = array<i64: 1, 128>}, {pipeline_mode = #tpu.pipeline_mode<synchronous>, transform_indices = @transform_3, window_bounds = array<i64: 1, 128>}, {pipeline_mode = #tpu.pipeline_mode<synchronous>, transform_indices = @transform_4, window_bounds = array<i64: 1, 128>}, {transform_indices = @transform_5, window_bounds = array<i64: 32, 128>}]} {
    %c0 = arith.constant 0 : index
    %c0_0 = arith.constant 0 : index
    %0 = vector.load %arg1[%c0, %c0_0] : memref<32x128xbf16, #tpu.memory_space<vmem>>, vector<32x128xbf16>
    %c0_1 = arith.constant 0 : index
    %c0_2 = arith.constant 0 : index
    %1 = vector.load %arg2[%c0_1, %c0_2] : memref<128x128xbf16, #tpu.memory_space<vmem>>, vector<128x128xbf16>
    %cst = arith.constant dense<0.000000e+00> : vector<32x128xf32>
    %2 = tpu.matmul %0, %1, %cst {dimension_numbers = #tpu.dot_dimension_numbers<[1], [0], [0], [1], [0, 0, 1, 1], [], []>} : vector<32x128xbf16>, vector<128x128xbf16>, vector<32x128xf32> -> vector<32x128xf32>
    %c0_3 = arith.constant 0 : index
    %c0_4 = arith.constant 0 : index
    %3 = vector.load %arg3[%c0_3, %c0_4] : memref<1x128xf32, #tpu.memory_space<vmem>>, vector<1x128xf32>
    %4 = vector.broadcast %3 : vector<1x128xf32> to vector<32x128xf32>
    %5 = arith.addf %2, %4 : vector<32x128xf32>
    %cst_5 = arith.constant dense<0.000000e+00> : vector<32xf32>
    %6 = vector.multi_reduction <add>, %5, %cst_5 [1] : vector<32x128xf32> to vector<32xf32>
    %7 = vector.shape_cast %6 : vector<32xf32> to vector<32x1xf32>
    %cst_6 = arith.constant 3.125000e-02 : f32
    %8 = vector.broadcast %cst_6 : f32 to vector<32x1xf32>
    %9 = arith.mulf %7, %8 : vector<32x1xf32>
    %10 = vector.broadcast %9 : vector<32x1xf32> to vector<32x128xf32>
    %11 = arith.subf %5, %10 : vector<32x128xf32>
    %12 = tpu.iota {dimensions = array<i32: 1>} : vector<1x128xi32>
    %c32_i32 = arith.constant 32 : i32
    %13 = vector.broadcast %c32_i32 : i32 to vector<1x128xi32>
    %14 = arith.cmpi slt, %12, %13 : vector<1x128xi32>
    %cst_7 = arith.constant 0.000000e+00 : f32
    %15 = vector.shape_cast %14 : vector<1x128xi1> to vector<1x128xi1>
    %16 = vector.broadcast %15 : vector<1x128xi1> to vector<32x128xi1>
    %17 = vector.broadcast %cst_7 : f32 to vector<32x128xf32>
    %18 = arith.select %16, %11, %17 : vector<32x128xi1>, vector<32x128xf32>
    %19 = arith.mulf %18, %18 : vector<32x128xf32>
    %cst_8 = arith.constant dense<0.000000e+00> : vector<32xf32>
    %20 = vector.multi_reduction <add>, %19, %cst_8 [1] : vector<32x128xf32> to vector<32xf32>
    %21 = vector.shape_cast %20 : vector<32xf32> to vector<32x1xf32>
    %cst_9 = arith.constant 3.125000e-02 : f32
    %22 = vector.broadcast %cst_9 : f32 to vector<32x1xf32>
    %23 = arith.mulf %21, %22 : vector<32x1xf32>
    %cst_10 = arith.constant 9.99999974E-6 : f32
    %24 = vector.broadcast %cst_10 : f32 to vector<32x1xf32>
    %25 = arith.addf %23, %24 : vector<32x1xf32>
    %26 = math.rsqrt %25 : vector<32x1xf32>
    %27 = vector.broadcast %26 : vector<32x1xf32> to vector<32x128xf32>
    %28 = arith.mulf %11, %27 : vector<32x128xf32>
    %c0_11 = arith.constant 0 : index
    %c0_12 = arith.constant 0 : index
    %29 = vector.load %arg4[%c0_11, %c0_12] : memref<1x128xf32, #tpu.memory_space<vmem>>, vector<1x128xf32>
    %30 = vector.broadcast %29 : vector<1x128xf32> to vector<32x128xf32>
    %31 = arith.mulf %28, %30 : vector<32x128xf32>
    %c0_13 = arith.constant 0 : index
    %c0_14 = arith.constant 0 : index
    %32 = vector.load %arg5[%c0_13, %c0_14] : memref<1x128xf32, #tpu.memory_space<vmem>>, vector<1x128xf32>
    %33 = vector.broadcast %32 : vector<1x128xf32> to vector<32x128xf32>
    %34 = arith.addf %31, %33 : vector<32x128xf32>
    %c0_15 = arith.constant 0 : index
    %c0_16 = arith.constant 0 : index
    %35 = vector.load %arg6[%c0_15, %c0_16] : memref<32x128xf32, #tpu.memory_space<vmem>>, vector<32x128xf32>
    tpu.vector_store %arg6[%c0_15, %c0_16], %34 {strides = array<i32>} : memref<32x128xf32, #tpu.memory_space<vmem>>, vector<32x128xf32>,
    return
  }
  func.func @transform_0(%arg0: i32) -> (i32, i32) {
    %c0_i32 = arith.constant 0 : i32
    %c0_i32_0 = arith.constant 0 : i32
    return %arg0, %c0_i32 : i32, i32
  }
  func.func @transform_1(%arg0: i32) -> (i32, i32) {
    %c0_i32 = arith.constant 0 : i32
    %c0_i32_0 = arith.constant 0 : i32
    %c0_i32_1 = arith.constant 0 : i32
    return %c0_i32, %c0_i32_0 : i32, i32
  }
  func.func @transform_2(%arg0: i32) -> (i32, i32) {
    %c0_i32 = arith.constant 0 : i32
    %c0_i32_0 = arith.constant 0 : i32
    %c0_i32_1 = arith.constant 0 : i32
    return %c0_i32, %c0_i32_0 : i32, i32
  }
  func.func @transform_3(%arg0: i32) -> (i32, i32) {
    %c0_i32 = arith.constant 0 : i32
    %c0_i32_0 = arith.constant 0 : i32
    %c0_i32_1 = arith.constant 0 : i32
    return %c0_i32, %c0_i32_0 : i32, i32
  }
  func.func @transform_4(%arg0: i32) -> (i32, i32) {
    %c0_i32 = arith.constant 0 : i32
    %c0_i32_0 = arith.constant 0 : i32
    %c0_i32_1 = arith.constant 0 : i32
    return %c0_i32, %c0_i32_0 : i32, i32
  }
  func.func @transform_5(%arg0: i32) -> (i32, i32) {
    %c0_i32 = arith.constant 0 : i32
    %c0_i32_0 = arith.constant 0 : i32
    return %arg0, %c0_i32 : i32, i32
  }
}

</mosaic_0001>

<llo_original>
// kernel: tpu_custom_call.1
$region0: #{tpu_custom_call.1}
  #allocation0 [shape = 'u32[]', space=smem, size = 0x4, offset = 0x4, fixed_abs, tag = 'smem constant byte address 0x4 - core index']
  #allocation1 [shape = 'u32[144,128]{1,0:T(1,128)}', space=vmem, size = 0x12000, scoped, tag = 'internal scratch']
  %s0 = inlined_call_operand.hbm [shape: bf16[32,128], index: 0, kind: input, shape index: {}]
  %s1 = inlined_call_operand.hbm [shape: bf16[128,128], index: 1, kind: input, shape index: {}]
  %s2 = inlined_call_operand.vmem [shape: f32[1,128], index: 2, kind: input, shape index: {}]
  %s3 = inlined_call_operand.vmem [shape: f32[1,128], index: 3, kind: input, shape index: {}]
  %s4 = inlined_call_operand.vmem [shape: f32[1,128], index: 4, kind: input, shape index: {}]
  %s5 = inlined_call_operand.hbm [shape: f32[32,128], index: 5, kind: output, shape index: {}]
  %s6 = sld [smem:[#allocation0]]
  $region38: #{tpu_custom_call.1} parent=0
    _
  %s8 = ssub.s32 1, %s6
  %s9 = scalar_select 0, %s8, %s6
  $region1: #{tpu_custom_call.1} parent=0
    #allocation2 [shape = 'u8[8192]{0}', space=vmem, size = 0x2000, scoped, tag = 'input window, operand 0, single buffered']
    #allocation3 [shape = 's32[1]{0}', space=sflag, size = 0x4, scoped, tag = 'scoped memory for tpu_custom_call.1']
    #allocation4 [shape = 's32[1]{0}', space=sflag, size = 0x4, scoped, tag = 'scoped memory for tpu_custom_call.1']
    #allocation5 [shape = 'u8[32768]{0}', space=vmem, size = 0x8000, scoped, tag = 'input window, operand 1, single buffered']
    #allocation6 [shape = 's32[1]{0}', space=sflag, size = 0x4, scoped, tag = 'scoped memory for tpu_custom_call.1']
    #allocation7 [shape = 'u8[16384]{0}', space=vmem, size = 0x4000, scoped, tag = 'output window, operand 0, single buffered']
    %10 = vsyncpa [#allocation3], 0
    %11 = vsyncpa [#allocation6], 0
    %12 = vsyncpa [#allocation4], 0
    // Predicated region
    $region2: #{tpu_custom_call.1} parent=1 // pred_check
      _
    $region3: #{tpu_custom_call.1} parent=1 // pred_check_branch
      %14 = sbr.rel (0) target = $region5
    $region4: #{tpu_custom_call.1} parent=1 // pred_region
      %s16 = ssub.s32 256, 256
      %17 = vsyncadd [#allocation3], %s16
      %s18 = sshll.u32 [#allocation2], 4
      %s19 = int_to_ptr.vmem [resolvable:$true] %s18
      %24 = dma.hbm_to_vmem [thread:$0]  %s0, 256, %s19, [#allocation3], 64, 64, 4
    $region5: #{tpu_custom_call.1} parent=1 // pred_fallthru
      _
    // Predicated region
    $region6: #{tpu_custom_call.1} parent=1 // pred_check
      _
    $region7: #{tpu_custom_call.1} parent=1 // pred_check_branch
      %26 = sbr.rel (0) target = $region9
    $region8: #{tpu_custom_call.1} parent=1 // pred_region
      %s28 = ssub.s32 1024, 1024
      %29 = vsyncadd [#allocation6], %s28
      %s30 = sshll.u32 [#allocation5], 4
      %s31 = int_to_ptr.vmem [resolvable:$true] %s30
      %36 = dma.hbm_to_vmem [thread:$0]  %s1, 1024, %s31, [#allocation6], 64, 64, 4
    $region9: #{tpu_custom_call.1} parent=1 // pred_fallthru
      _
    // Predicated region
    $region10: #{tpu_custom_call.1} parent=1 // pred_check
      _
    $region11: #{tpu_custom_call.1} parent=1 // pred_check_branch
      %38 = sbr.rel (0) target = $region13
    $region12: #{tpu_custom_call.1} parent=1 // pred_region
      _
    $region13: #{tpu_custom_call.1} parent=1 // pred_fallthru
      _
    // Predicated region
    $region14: #{tpu_custom_call.1} parent=1 // pred_check
      _
    $region15: #{tpu_custom_call.1} parent=1 // pred_check_branch
      %40 = sbr.rel (0) target = $region17
    $region16: #{tpu_custom_call.1} parent=1 // pred_region
      _
    $region17: #{tpu_custom_call.1} parent=1 // pred_fallthru
      _
    // Predicated region
    $region18: #{tpu_custom_call.1} parent=1 // pred_check
      _
    $region19: #{tpu_custom_call.1} parent=1 // pred_check_branch
      %42 = sbr.rel (0) target = $region21
    $region20: #{tpu_custom_call.1} parent=1 // pred_region
      _
    $region21: #{tpu_custom_call.1} parent=1 // pred_fallthru
      _
    // Predicated region
    $region22: #{tpu_custom_call.1} parent=1 // pred_check
      _
    $region23: #{tpu_custom_call.1} parent=1 // pred_check_branch
      %44 = sbr.rel (0) target = $region25
    $region24: #{tpu_custom_call.1} parent=1 // pred_region
      %45 = dma.done [#allocation3], 256
    $region25: #{tpu_custom_call.1} parent=1 // pred_fallthru
      _
    // Predicated region
    $region26: #{tpu_custom_call.1} parent=1 // pred_check
      _
    $region27: #{tpu_custom_call.1} parent=1 // pred_check_branch
      %47 = sbr.rel (0) target = $region29
    $region28: #{tpu_custom_call.1} parent=1 // pred_region
      %48 = dma.done [#allocation6], 1024
    $region29: #{tpu_custom_call.1} parent=1 // pred_fallthru
      _
    %v50 = vld [vmem:[#allocation2] sm:$0xf]
    %v51 = vld [vmem:[#allocation2 + $0x4] sm:$0xf]
    %v52 = vld [vmem:[#allocation2 + $0x8] sm:$0xf]
    %v53 = vld [vmem:[#allocation2 + $0xc] sm:$0xf]
    %v54 = vld [vmem:[#allocation5] sm:$0xf]
    %v55 = vld [vmem:[#allocation5 + $0x4] sm:$0xf]
    %v56 = vld [vmem:[#allocation5 + $0x8] sm:$0xf]
    %v57 = vld [vmem:[#allocation5 + $0xc] sm:$0xf]
    %v58 = vld [vmem:[#allocation5 + $0x10] sm:$0xf]
    %v59 = vld [vmem:[#allocation5 + $0x14] sm:$0xf]
    %v60 = vld [vmem:[#allocation5 + $0x18] sm:$0xf]
    %v61 = vld [vmem:[#allocation5 + $0x1c] sm:$0xf]
    %v62 = vld [vmem:[#allocation5 + $0x20] sm:$0xf]
    %v63 = vld [vmem:[#allocation5 + $0x24] sm:$0xf]
    %v64 = vld [vmem:[#allocation5 + $0x28] sm:$0xf]
    %v65 = vld [vmem:[#allocation5 + $0x2c] sm:$0xf]
    %v66 = vld [vmem:[#allocation5 + $0x30] sm:$0xf]
    %v67 = vld [vmem:[#allocation5 + $0x34] sm:$0xf]
    %v68 = vld [vmem:[#allocation5 + $0x38] sm:$0xf]
    %v69 = vld [vmem:[#allocation5 + $0x3c] sm:$0xf]
    %v70 = vld [vmem:[%s2] sm:$0x1]
    %v72 = vlaneseq
    %v73 = vshrl.u32 %v72, 7
    %v74 = vsub.s32 0, %v73
    %v75 = vrot.slane %v70, %v74
    %v81 = vunpack.c.l.b16 %v50
    %v82 = vunpack.c.l.b16 %v51
    %v83 = vunpack.c.l.b16 %v52
    %v84 = vunpack.c.l.b16 %v53
    %v85 = vpack.c.b16 %v82, %v81
    %v86 = vpack.c.b16 %v84, %v83
    %v105 = vunpack.c.l.b16 %v54
    %v106 = vunpack.c.l.b16 %v55
    %v107 = vunpack.c.l.b16 %v56
    %v108 = vunpack.c.l.b16 %v57
    %v109 = vunpack.c.l.b16 %v58
    %v110 = vunpack.c.l.b16 %v59
    %v111 = vunpack.c.l.b16 %v60
    %v112 = vunpack.c.l.b16 %v61
    %v113 = vunpack.c.l.b16 %v62
    %v114 = vunpack.c.l.b16 %v63
    %v115 = vunpack.c.l.b16 %v64
    %v116 = vunpack.c.l.b16 %v65
    %v117 = vunpack.c.l.b16 %v66
    %v118 = vunpack.c.l.b16 %v67
    %v119 = vunpack.c.l.b16 %v68
    %v120 = vunpack.c.l.b16 %v69
    %v121 = vpack.c.b16 %v106, %v105
    %v122 = vpack.c.b16 %v108, %v107
    %v123 = vpack.c.b16 %v110, %v109
    %v124 = vpack.c.b16 %v112, %v111
    %v125 = vpack.c.b16 %v114, %v113
    %v126 = vpack.c.b16 %v116, %v115
    %v127 = vpack.c.b16 %v118, %v117
    %v128 = vpack.c.b16 %v120, %v119
    %137 = vmatprep.subr.bf16.mxu0 0
    %138 = vmatpush1.bf16.msra.mxu0 %v121
    %139 = vmatprep.subr.bf16.mxu0 0
    %140 = vmatpush1.bf16.msra.mxu0 %v122
    %141 = vmatprep.subr.bf16.mxu0 0
    %142 = vmatpush1.bf16.msra.mxu0 %v123
    %143 = vmatprep.subr.bf16.mxu0 0
    %144 = vmatpush1.bf16.msra.mxu0 %v124
    %145 = vmatprep.subr.bf16.mxu0 0
    %146 = vmatpush1.bf16.msra.mxu0 %v125
    %147 = vmatprep.subr.bf16.mxu0 0
    %148 = vmatpush1.bf16.msra.mxu0 %v126
    %149 = vmatprep.subr.bf16.mxu0 0
    %150 = vmatpush1.bf16.msra.mxu0 %v127
    %151 = vmatprep.subr.bf16.mxu0 0
    %152 = vmatpush1.bf16.msra.mxu0 %v128
    %153 = vmatprep.subr.bf16.mxu0 0
    %154 = vmatpush1.bf16.msra.mxu0 0
    %155 = vmatprep.subr.bf16.mxu0 0
    %156 = vmatpush1.bf16.msra.mxu0 0
    %157 = vmatprep.subr.bf16.mxu0 0
    %158 = vmatpush1.bf16.msra.mxu0 0
    %159 = vmatprep.subr.bf16.mxu0 0
    %160 = vmatpush1.bf16.msra.mxu0 0
    %161 = vmatprep.subr.bf16.mxu0 0
    %162 = vmatpush1.bf16.msra.mxu0 0
    %163 = vmatprep.subr.bf16.mxu0 0
    %164 = vmatpush1.bf16.msra.mxu0 0
    %165 = vmatprep.subr.bf16.mxu0 0
    %166 = vmatpush1.bf16.msra.mxu0 0
    %167 = vmatprep.subr.bf16.mxu0 0
    %168 = vmatpush1.bf16.msra.mxu0 0
    %169 = vmatprep.mubr.bf16.mxu0 0
    %170 = vmatmul.mubr.bf16.gmra.mrb[0].mxu0 %v85
    %v171 = vpop.f32.mrb[0].mxu0
    %v172 = vadd.f32 %v75, %v171
    %v173 = vpop.f32.mrb[0].mxu0
    %v174 = vpop.f32.mrb[0].mxu0
    %v175 = vadd.f32 %v75, %v174
    %v176 = vpop.f32.mrb[0].mxu0
    %177 = vmatprep.mubr.bf16.mxu0 0
    %178 = vmatmul.mubr.bf16.gmra.mrb[0].mxu0 %v86
    %v179 = vpop.f32.mrb[0].mxu0
    %v180 = vadd.f32 %v75, %v179
    %v181 = vpop.f32.mrb[0].mxu0
    %v182 = vpop.f32.mrb[0].mxu0
    %v183 = vadd.f32 %v75, %v182
    %v184 = vpop.f32.mrb[0].mxu0
    %185 = vdwg.mxu0
    %186 = vadd.xlane.f32.xlu0 %v172
    %v187 = vpop.xlane.xlu0 %186
    %188 = vadd.xlane.f32.xlu0 %v175
    %v189 = vpop.xlane.xlu0 %188
    %190 = vadd.xlane.f32.xlu0 %v180
    %v191 = vpop.xlane.xlu0 %190
    %192 = vadd.xlane.f32.xlu0 %v183
    %v193 = vpop.xlane.xlu0 %192
    %v194 = vmul.f32 %v187, 0.03125
    %v195 = vmul.f32 %v189, 0.03125
    %v196 = vmul.f32 %v191, 0.03125
    %v197 = vmul.f32 %v193, 0.03125
    %v198 = vsub.f32 %v172, %v194
    %v199 = vsub.f32 %v175, %v195
    %v200 = vsub.f32 %v180, %v196
    %v201 = vsub.f32 %v183, %v197
    %v202 = vlaneseq
    %v203 = vand.u32 %v202, 127
    %vm204 = vcmp.lt.s32.totalorder %v203, 32
    %v205 = vsel %vm204, 1, 0
    %vm206 = vcmp.eq.s32.totalorder %v205, 1
    %v207 = vsel %vm206, %v198, 0.0
    %v208 = vsel %vm206, %v199, 0.0
    %v209 = vsel %vm206, %v200, 0.0
    %v210 = vsel %vm206, %v201, 0.0
    %v211 = vmul.f32 %v207, %v207
    %v212 = vmul.f32 %v208, %v208
    %v213 = vmul.f32 %v209, %v209
    %v214 = vmul.f32 %v210, %v210
    %215 = vadd.xlane.f32.xlu0 %v211
    %v216 = vpop.xlane.xlu0 %215
    %217 = vadd.xlane.f32.xlu0 %v212
    %v218 = vpop.xlane.xlu0 %217
    %219 = vadd.xlane.f32.xlu0 %v213
    %v220 = vpop.xlane.xlu0 %219
    %221 = vadd.xlane.f32.xlu0 %v214
    %v222 = vpop.xlane.xlu0 %221
    %v223 = vmul.f32 %v216, 0.03125
    %v224 = vmul.f32 %v218, 0.03125
    %v225 = vmul.f32 %v220, 0.03125
    %v226 = vmul.f32 %v222, 0.03125
    %v227 = vadd.f32 %v223, 1e-05
    %v228 = vadd.f32 %v224, 1e-05
    %v229 = vadd.f32 %v225, 1e-05
    %v230 = vadd.f32 %v226, 1e-05
    %v231 = vrsqrt.pop %v227
    %v232 = vrsqrt.pop %v228
    %v233 = vrsqrt.pop %v229
    %v234 = vrsqrt.pop %v230
    %v235 = vmul.f32 %v198, %v231
    %v236 = vmul.f32 %v199, %v232
    %v237 = vmul.f32 %v200, %v233
    %v238 = vmul.f32 %v201, %v234
    %v239 = vld [vmem:[%s3] sm:$0x1]
    %v241 = vlaneseq
    %v242 = vshrl.u32 %v241, 7
    %v243 = vsub.s32 0, %v242
    %v244 = vrot.slane %v239, %v243
    %v246 = vmul.f32 %v235, %v244
    %v247 = vmul.f32 %v236, %v244
    %v248 = vmul.f32 %v237, %v244
    %v249 = vmul.f32 %v238, %v244
    %v250 = vld [vmem:[%s4] sm:$0x1]
    %v252 = vlaneseq
    %v253 = vshrl.u32 %v252, 7
    %v254 = vsub.s32 0, %v253
    %v255 = vrot.slane %v250, %v254
    %v257 = vadd.f32 %v246, %v255
    %v258 = vadd.f32 %v247, %v255
    %v259 = vadd.f32 %v248, %v255
    %v260 = vadd.f32 %v249, %v255
    %261 = vst [vmem:[#allocation7] sm:$0xff] %v257
    %262 = vst [vmem:[#allocation7 + $0x8] sm:$0xff] %v258
    %263 = vst [vmem:[#allocation7 + $0x10] sm:$0xff] %v259
    %264 = vst [vmem:[#allocation7 + $0x18] sm:$0xff] %v260
    // Predicated region
    $region30: #{tpu_custom_call.1} parent=1 // pred_check
      _
    $region31: #{tpu_custom_call.1} parent=1 // pred_check_branch
      %266 = sbr.rel (0) target = $region33
    $region32: #{tpu_custom_call.1} parent=1 // pred_region
      %s268 = ssub.s32 512, 512
      %269 = vsyncadd [#allocation4], %s268
      %s270 = sshll.u32 [#allocation7], 4
      %s271 = int_to_ptr.vmem [resolvable:$true] %s270
      %276 = dma.vmem_to_hbm [thread:$0]  %s271, 512, %s5, [#allocation4], 128, 128, 8
    $region33: #{tpu_custom_call.1} parent=1 // pred_fallthru
      _
    // Predicated region
    $region34: #{tpu_custom_call.1} parent=1 // pred_check
      _
    $region35: #{tpu_custom_call.1} parent=1 // pred_check_branch
      %278 = sbr.rel (0) target = $region37
    $region36: #{tpu_custom_call.1} parent=1 // pred_region
      %279 = dma.done [#allocation4], 512
    $region37: #{tpu_custom_call.1} parent=1 // pred_fallthru
      _
    %280 = vsyncpa [#allocation3], 1
    %281 = vsyncpa [#allocation6], 1
    %282 = vsyncpa [#allocation4], 1

</llo_original>
